<compile_context>
chip_gen: v7x
topology: tpu7x:2x2x1
jax: 0.10.0
libtpu: 0.0.40
codegen_flags: <defaults>
</compile_context>

<pallas_src>
import jax
import jax.numpy as jnp
from jax.experimental import pallas as pl
from jax.experimental.pallas import tpu as pltpu


def gcn_kernel(a_ref, x_ref, w1_ref, b1_ref, w2_ref, b2_ref, o_ref):
    # a_ref : (Bt, N, N) bf16, x_ref : (Bt, N, in_c) f32
    # w1_ref: (in_c, hid_c+1) f32 (augmented), b1_ref: (1, hid_c+1) f32
    # w2_ref: (hid_c, out_c) f32, b2_ref: (1, out_c) f32
    # o_ref : (Bt, 1, N*out_c)  -- lane-dense output
    a = a_ref[...]                                  # keep bf16 for the MXU
    x = x_ref[...].astype(jnp.float32)
    bt, n, in_c = x.shape
    hid_c = w1_ref.shape[1] - 1                     # last column is the ones-fold
    out_c = w2_ref.shape[1]

    # ---- layer 1 linear (augmented: last channel is constant 1 per node) ----
    z1a = jnp.dot(x.reshape(bt * n, in_c), w1_ref[...],
                  preferred_element_type=jnp.float32).reshape(bt, n, hid_c + 1)
    z1a = z1a + b1_ref[...]                         # (Bt, N, hid_c+1), [..., -1] == 1

    # ---- aggregation on the MXU (bf16 in, f32 accumulate) ----
    # A @ [Z1 | 1] gives both A@Z1 and rowsum(A) in one pass (hid_c+1 <= 128 lanes).
    az1a = jnp.einsum("bij,bjc->bic", a, z1a.astype(jnp.bfloat16),
                      preferred_element_type=jnp.float32)

    deg = az1a[..., hid_c:] + 1.0                   # rowsum(A) + 1   (Bt, N, 1)
    # inf -> 0 semantics of the PyTorch code; exact reciprocal (tiny tensor).
    inv_deg = jnp.where(deg == 0.0, 0.0, 1.0 / deg)

    # G @ Z1 = inv_deg * (A@Z1 + Z1) ; ReLU
    h1 = jnp.maximum(inv_deg * (az1a[..., :hid_c] + z1a[..., :hid_c]), 0.0)

    # ---- layer 2 ----
    z2 = jnp.dot(h1.reshape(bt * n, hid_c), w2_ref[...],
                 preferred_element_type=jnp.float32).reshape(bt, n, out_c)
    z2 = z2 + b2_ref[...]
    az2 = jnp.einsum("bij,bjc->bic", a, z2.astype(jnp.bfloat16),
                     preferred_element_type=jnp.float32)
    h2 = jnp.maximum(inv_deg * (az2 + z2), 0.0)     # (Bt, N, out_c)

    # lane-dense store: one unmasked 128-lane-wide row per batch element.
    o_ref[...] = h2.reshape(bt, 1, n * out_c).astype(o_ref.dtype)


def _pick_block_b(B, N, in_c, hid_c, out_c, budget_bytes):
    """Largest batch block that (a) divides B, (b) leaves >= min(B, 4) grid
    steps so double-buffering can hide the NxN adjacency DMA, and (c) keeps
    the estimated per-step working set (double-buffered blocks + in-kernel
    temporaries + weights) under `budget_bytes`."""

    def working_set(bb):
        a_blk = 2 * bb * N * N * 2                       # bf16 A, double-buffered
        x_blk = 2 * bb * N * in_c * 4
        o_blk = 2 * bb * N * out_c * 4
        # rough bound on live in-kernel temporaries (f32 values + bf16 casts)
        tmp = bb * N * (N * 2 + 6 * (hid_c + 1) * 4 + 6 * out_c * 4 + 8)
        w = 2 * ((in_c + 1) * (hid_c + 1) + (hid_c + 1) * out_c + out_c) * 4
        return a_blk + x_blk + o_blk + tmp + w

    target_steps = min(B, 4)
    best = 1
    for bb in range(1, B + 1):
        if B % bb:
            continue
        if working_set(bb) > budget_bytes:
            continue
        if B // bb >= target_steps:
            best = max(best, bb)
    return best
    # TODO(synk): for very large N (2*N^2 bytes approaching the budget even at
    # block_b=1, e.g. on v7x's 64 MiB VMEM), add a second grid axis that
    # row-tiles the adjacency block instead of shrinking block_b.
    # TODO(synk): on v6e/v5e (128 MiB VMEM) pipeline_mode=pl.Buffered(3) on the
    # graph BlockSpec can hide longer A-block DMAs; skipped here to stay
    # generation-agnostic (counterproductive under v7x's 64 MiB).


def gcn_forward(graph, x, w1, b1, w2, b2):
    B, N, _ = graph.shape
    in_c = x.shape[-1]
    hid_c = w1.shape[1]
    out_c = w2.shape[1]

    # Fold rowsum(A) into the first MXU pass: augment W1 with a zero column and
    # b1 with a ones column so (X W1a + b1a)[..., -1] == 1 for every node and
    # A @ [Z1 | 1] carries rowsum(A) in its last lane for free.
    w1a = jnp.concatenate([w1, jnp.zeros((in_c, 1), w1.dtype)], axis=1)
    b1a = jnp.concatenate([b1, jnp.ones((1, 1), b1.dtype)], axis=1)

    # Adjacency dominates HBM traffic and VMEM: feed it to the MXU in bf16.
    a_bf16 = graph.astype(jnp.bfloat16)

    vmem_limit = 48 << 20                      # < v7x 64 MiB physical; fine on v5e/v6e
    block_b = _pick_block_b(B, N, in_c, hid_c, out_c, budget_bytes=28 << 20)
    grid = (B // block_b,)

    flops = B * N * (2 * N * (hid_c + 1) + 2 * in_c * (hid_c + 1)
                     + 2 * hid_c * out_c + 2 * N * out_c)
    bytes_accessed = (2 * B * N * N                      # bf16 adjacency
                      + 4 * (B * N * in_c + B * N * out_c
                             + in_c * (hid_c + 1) + (hid_c + 1)
                             + hid_c * out_c + out_c))
    cost = pl.CostEstimate(flops=flops, transcendentals=0,
                           bytes_accessed=bytes_accessed)

    out = pl.pallas_call(
        gcn_kernel,
        out_shape=jax.ShapeDtypeStruct((B, 1, N * out_c), x.dtype),
        grid=grid,
        in_specs=[
            pl.BlockSpec((block_b, N, N), lambda b: (b, 0, 0)),
            pl.BlockSpec((block_b, N, in_c), lambda b: (b, 0, 0)),
            pl.BlockSpec((in_c, hid_c + 1), lambda b: (0, 0)),
            pl.BlockSpec((1, hid_c + 1), lambda b: (0, 0)),
            pl.BlockSpec((hid_c, out_c), lambda b: (0, 0)),
            pl.BlockSpec((1, out_c), lambda b: (0, 0)),
        ],
        out_specs=pl.BlockSpec((block_b, 1, N * out_c), lambda b: (b, 0, 0)),
        compiler_params=pltpu.CompilerParams(
            dimension_semantics=("parallel",),
            vmem_limit_bytes=vmem_limit),
        cost_estimate=cost,
    )(a_bf16, x, w1a, b1a, w2, b2)

    # lane-dense (B, 1, N*out_c) -> (B, N, out_c) is a free row-major reshape;
    # [:, :, None, :] matches output_2.unsqueeze(2) -> (B, N, 1, out_c)
    return out.reshape(B, N, out_c)[:, :, None, :]


def gcn_reference(graph, x, w1, b1, w2, b2):
    """Pure-JAX reference mirroring the PyTorch module (f32 throughout)."""
    N = graph.shape[1]
    a_hat = graph + jnp.eye(N, dtype=graph.dtype)[None]
    deg = jnp.sum(a_hat, axis=-1, keepdims=True)
    inv_deg = jnp.where(deg == 0.0, 0.0, 1.0 / deg)
    g = a_hat * inv_deg
    h1 = jnp.maximum(jnp.einsum("bij,bjc->bic", g, x @ w1 + b1), 0.0)
    h2 = jnp.maximum(jnp.einsum("bij,bjc->bic", g, h1 @ w2 + b2), 0.0)
    return h2[:, :, None, :]


def init_linear(key, fan_in, fan_out):
    # deterministic nn.Linear-style init: U(-1/sqrt(fan_in), 1/sqrt(fan_in))
    kw, kb = jax.random.split(key)
    bound = 1.0 / jnp.sqrt(jnp.float32(fan_in))
    w = jax.random.uniform(kw, (fan_in, fan_out), jnp.float32, -bound, bound)
    b = jax.random.uniform(kb, (1, fan_out), jnp.float32, -bound, bound)
    return w, b


if __name__ == "__main__":
    B, N, in_c, hid_c, out_c = 2, 16, 4, 32, 8

    key = jax.random.PRNGKey(0)
    k_graph, k_x, k_l1, k_l2 = jax.random.split(key, 4)

    graph = jax.random.uniform(k_graph, (B, N, N), jnp.float32)   # adjacency
    x = jax.random.normal(k_x, (B, N, in_c), jnp.float32)         # node features

    w1, b1 = init_linear(k_l1, in_c, hid_c)
    w2, b2 = init_linear(k_l2, hid_c, out_c)

    out = gcn_forward(graph, x, w1, b1, w2, b2)
    jax.block_until_ready(out)
    assert out.shape == (B, N, 1, out_c)

    ref = gcn_reference(graph, x, w1, b1, w2, b2)
    # tolerance covers the bf16 MXU feed of the adjacency / aggregated features
    assert jnp.allclose(out, ref, rtol=5e-2, atol=1e-2), "mismatch vs reference"

    print("KERNEL_OK")
</pallas_src>

<mosaic_0001>
module attributes {stable_mosaic.version = 11 : i64} {
  func.func @gcn_kernel(%arg0: i32, %arg1: memref<1x16x16xbf16, #tpu.memory_space<vmem>>, %arg2: memref<1x16x4xf32, #tpu.memory_space<vmem>>, %arg3: memref<4x33xf32, #tpu.memory_space<vmem>>, %arg4: memref<1x33xf32, #tpu.memory_space<vmem>>, %arg5: memref<32x8xf32, #tpu.memory_space<vmem>>, %arg6: memref<1x8xf32, #tpu.memory_space<vmem>>, %arg7: memref<1x1x128xf32, #tpu.memory_space<vmem>>) attributes {dimension_semantics = [#tpu.dimension_semantics<parallel>], iteration_bounds = array<i64: 2>, scalar_prefetch = 0 : i64, scratch_operands = 0 : i64, tpu.core_type = #tpu.core_type<tc>, window_params = [{transform_indices = @transform_0, window_bounds = array<i64: 1, 16, 16>}, {transform_indices = @transform_1, window_bounds = array<i64: 1, 16, 4>}, {pipeline_mode = #tpu.pipeline_mode<synchronous>, transform_indices = @transform_2, window_bounds = array<i64: 4, 33>}, {pipeline_mode = #tpu.pipeline_mode<synchronous>, transform_indices = @transform_3, window_bounds = array<i64: 1, 33>}, {pipeline_mode = #tpu.pipeline_mode<synchronous>, transform_indices = @transform_4, window_bounds = array<i64: 32, 8>}, {pipeline_mode = #tpu.pipeline_mode<synchronous>, transform_indices = @transform_5, window_bounds = array<i64: 1, 8>}, {transform_indices = @transform_6, window_bounds = array<i64: 1, 1, 128>}]} {
    %c0 = arith.constant 0 : index
    %c0_0 = arith.constant 0 : index
    %c0_1 = arith.constant 0 : index
    %0 = vector.load %arg1[%c0, %c0_0, %c0_1] : memref<1x16x16xbf16, #tpu.memory_space<vmem>>, vector<1x16x16xbf16>
    %c0_2 = arith.constant 0 : index
    %c0_3 = arith.constant 0 : index
    %c0_4 = arith.constant 0 : index
    %1 = vector.load %arg2[%c0_2, %c0_3, %c0_4] : memref<1x16x4xf32, #tpu.memory_space<vmem>>, vector<1x16x4xf32>
    %2 = vector.shape_cast %1 : vector<1x16x4xf32> to vector<16x4xf32>
    %c0_5 = arith.constant 0 : index
    %c0_6 = arith.constant 0 : index
    %3 = vector.load %arg3[%c0_5, %c0_6] : memref<4x33xf32, #tpu.memory_space<vmem>>, vector<4x33xf32>
    %cst = arith.constant dense<0.000000e+00> : vector<16x33xf32>
    %4 = tpu.matmul %2, %3, %cst {dimension_numbers = #tpu.dot_dimension_numbers<[1], [0], [0], [1], [0, 0, 1, 1], [], []>} : vector<16x4xf32>, vector<4x33xf32>, vector<16x33xf32> -> vector<16x33xf32>
    %5 = vector.shape_cast %4 : vector<16x33xf32> to vector<1x16x33xf32>
    %c0_7 = arith.constant 0 : index
    %c0_8 = arith.constant 0 : index
    %6 = vector.load %arg4[%c0_7, %c0_8] : memref<1x33xf32, #tpu.memory_space<vmem>>, vector<1x33xf32>
    %7 = vector.shape_cast %6 : vector<1x33xf32> to vector<1x1x33xf32>
    %8 = vector.broadcast %7 : vector<1x1x33xf32> to vector<1x16x33xf32>
    %9 = arith.addf %5, %8 : vector<1x16x33xf32>
    %10 = arith.truncf %9 : vector<1x16x33xf32> to vector<1x16x33xbf16>
    "tpu.trace_start"() <{level = 10 : i32, message = "bij,bjc->bic"}> : () -> ()
    %cst_9 = arith.constant dense<0.000000e+00> : vector<1x16x33xf32>
    %11 = tpu.matmul %0, %10, %cst_9 {dimension_numbers = #tpu.dot_dimension_numbers<[2], [1], [1], [2], [0, 0, 0, 1, 1, 2], [0], [0]>} : vector<1x16x16xbf16>, vector<1x16x33xbf16>, vector<1x16x33xf32> -> vector<1x16x33xf32>
    "tpu.trace_stop"() : () -> ()
    %12 = vector.extract_strided_slice %11 {offsets = [0, 0, 32], sizes = [1, 16, 1], strides = [1, 1, 1]} : vector<1x16x33xf32> to vector<1x16x1xf32>
    %cst_10 = arith.constant 1.000000e+00 : f32
    %13 = vector.broadcast %cst_10 : f32 to vector<1x16x1xf32>
    %14 = arith.addf %12, %13 : vector<1x16x1xf32>
    %cst_11 = arith.constant 0.000000e+00 : f32
    %15 = vector.broadcast %cst_11 : f32 to vector<1x16x1xf32>
    %16 = arith.cmpf oeq, %14, %15 : vector<1x16x1xf32>
    %cst_12 = arith.constant 1.000000e+00 : f32
    %17 = vector.broadcast %cst_12 : f32 to vector<1x16x1xf32>
    %18 = arith.divf %17, %14 : vector<1x16x1xf32>
    %cst_13 = arith.constant 0.000000e+00 : f32
    %19 = vector.broadcast %cst_13 : f32 to vector<1x16x1xf32>
    %20 = arith.select %16, %19, %18 : vector<1x16x1xi1>, vector<1x16x1xf32>
    %21 = vector.extract_strided_slice %11 {offsets = [0, 0, 0], sizes = [1, 16, 32], strides = [1, 1, 1]} : vector<1x16x33xf32> to vector<1x16x32xf32>
    %22 = vector.extract_strided_slice %9 {offsets = [0, 0, 0], sizes = [1, 16, 32], strides = [1, 1, 1]} : vector<1x16x33xf32> to vector<1x16x32xf32>
    %23 = arith.addf %21, %22 : vector<1x16x32xf32>
    %24 = vector.broadcast %20 : vector<1x16x1xf32> to vector<1x16x32xf32>
    %25 = arith.mulf %24, %23 : vector<1x16x32xf32>
    %cst_14 = arith.constant 0.000000e+00 : f32
    %26 = vector.broadcast %cst_14 : f32 to vector<1x16x32xf32>
    %27 = arith.maximumf %25, %26 : vector<1x16x32xf32>
    %28 = vector.shape_cast %27 : vector<1x16x32xf32> to vector<16x32xf32>
    %c0_15 = arith.constant 0 : index
    %c0_16 = arith.constant 0 : index
    %29 = vector.load %arg5[%c0_15, %c0_16] : memref<32x8xf32, #tpu.memory_space<vmem>>, vector<32x8xf32>
    %cst_17 = arith.constant dense<0.000000e+00> : vector<16x8xf32>
    %30 = tpu.matmul %28, %29, %cst_17 {dimension_numbers = #tpu.dot_dimension_numbers<[1], [0], [0], [1], [0, 0, 1, 1], [], []>} : vector<16x32xf32>, vector<32x8xf32>, vector<16x8xf32> -> vector<16x8xf32>
    %31 = vector.shape_cast %30 : vector<16x8xf32> to vector<1x16x8xf32>
    %c0_18 = arith.constant 0 : index
    %c0_19 = arith.constant 0 : index
    %32 = vector.load %arg6[%c0_18, %c0_19] : memref<1x8xf32, #tpu.memory_space<vmem>>, vector<1x8xf32>
    %33 = vector.shape_cast %32 : vector<1x8xf32> to vector<1x1x8xf32>
    %34 = vector.broadcast %33 : vector<1x1x8xf32> to vector<1x16x8xf32>
    %35 = arith.addf %31, %34 : vector<1x16x8xf32>
    %36 = arith.truncf %35 : vector<1x16x8xf32> to vector<1x16x8xbf16>
    "tpu.trace_start"() <{level = 10 : i32, message = "bij,bjc->bic"}> : () -> ()
    %cst_20 = arith.constant dense<0.000000e+00> : vector<1x16x8xf32>
    %37 = tpu.matmul %0, %36, %cst_20 {dimension_numbers = #tpu.dot_dimension_numbers<[2], [1], [1], [2], [0, 0, 0, 1, 1, 2], [0], [0]>} : vector<1x16x16xbf16>, vector<1x16x8xbf16>, vector<1x16x8xf32> -> vector<1x16x8xf32>
    "tpu.trace_stop"() : () -> ()
    %38 = arith.addf %37, %35 : vector<1x16x8xf32>
    %39 = vector.broadcast %20 : vector<1x16x1xf32> to vector<1x16x8xf32>
    %40 = arith.mulf %39, %38 : vector<1x16x8xf32>
    %cst_21 = arith.constant 0.000000e+00 : f32
    %41 = vector.broadcast %cst_21 : f32 to vector<1x16x8xf32>
    %42 = arith.maximumf %40, %41 : vector<1x16x8xf32>
    %43 = vector.shape_cast %42 : vector<1x16x8xf32> to vector<1x1x128xf32>
    %c0_22 = arith.constant 0 : index
    %c0_23 = arith.constant 0 : index
    %c0_24 = arith.constant 0 : index
    %44 = vector.load %arg7[%c0_22, %c0_23, %c0_24] : memref<1x1x128xf32, #tpu.memory_space<vmem>>, vector<1x1x128xf32>
    tpu.vector_store %arg7[%c0_22, %c0_23, %c0_24], %43 {strides = array<i32>} : memref<1x1x128xf32, #tpu.memory_space<vmem>>, vector<1x1x128xf32>,
    return
  }
  func.func @transform_0(%arg0: i32) -> (i32, i32, i32) {
    %c0_i32 = arith.constant 0 : i32
    %c0_i32_0 = arith.constant 0 : i32
    %c0_i32_1 = arith.constant 0 : i32
    return %arg0, %c0_i32, %c0_i32_0 : i32, i32, i32
  }
  func.func @transform_1(%arg0: i32) -> (i32, i32, i32) {
    %c0_i32 = arith.constant 0 : i32
    %c0_i32_0 = arith.constant 0 : i32
    %c0_i32_1 = arith.constant 0 : i32
    return %arg0, %c0_i32, %c0_i32_0 : i32, i32, i32
  }
  func.func @transform_2(%arg0: i32) -> (i32, i32) {
    %c0_i32 = arith.constant 0 : i32
    %c0_i32_0 = arith.constant 0 : i32
    %c0_i32_1 = arith.constant 0 : i32
    return %c0_i32, %c0_i32_0 : i32, i32
  }
  func.func @transform_3(%arg0: i32) -> (i32, i32) {
    %c0_i32 = arith.constant 0 : i32
    %c0_i32_0 = arith.constant 0 : i32
    %c0_i32_1 = arith.constant 0 : i32
    return %c0_i32, %c0_i32_0 : i32, i32
  }
  func.func @transform_4(%arg0: i32) -> (i32, i32) {
    %c0_i32 = arith.constant 0 : i32
    %c0_i32_0 = arith.constant 0 : i32
    %c0_i32_1 = arith.constant 0 : i32
    return %c0_i32, %c0_i32_0 : i32, i32
  }
  func.func @transform_5(%arg0: i32) -> (i32, i32) {
    %c0_i32 = arith.constant 0 : i32
    %c0_i32_0 = arith.constant 0 : i32
    %c0_i32_1 = arith.constant 0 : i32
    return %c0_i32, %c0_i32_0 : i32, i32
  }
  func.func @transform_6(%arg0: i32) -> (i32, i32, i32) {
    %c0_i32 = arith.constant 0 : i32
    %c0_i32_0 = arith.constant 0 : i32
    %c0_i32_1 = arith.constant 0 : i32
    return %arg0, %c0_i32, %c0_i32_0 : i32, i32, i32
  }
}

</mosaic_0001>

<llo_original>
// kernel: tpu_custom_call.1
$region0: #{tpu_custom_call.1}
  #allocation0 [shape = 'u32[]', space=smem, size = 0x4, offset = 0x4, fixed_abs, tag = 'smem constant byte address 0x4 - core index']
  #allocation1 [shape = 'u32[144,128]{1,0:T(1,128)}', space=vmem, size = 0x12000, scoped, tag = 'internal scratch']
  %s0 = inlined_call_operand.vmem [shape: bf16[2,16,16], index: 0, kind: input, shape index: {}]
  %s1 = inlined_call_operand.vmem [shape: f32[2,16,4], index: 1, kind: input, shape index: {}]
  %s2 = inlined_call_operand.vmem [shape: f32[4,33], index: 2, kind: input, shape index: {}]
  %s3 = inlined_call_operand.vmem [shape: f32[1,33], index: 3, kind: input, shape index: {}]
  %s4 = inlined_call_operand.vmem [shape: f32[32,8], index: 4, kind: input, shape index: {}]
  %s5 = inlined_call_operand.vmem [shape: f32[1,8], index: 5, kind: input, shape index: {}]
  %s6 = inlined_call_operand.hbm [shape: f32[2,1,128], index: 6, kind: output, shape index: {}]
  %s7 = sld [smem:[#allocation0]]
  $region57: #{tpu_custom_call.1} parent=0
    _
  %s9 = ssub.s32 1, %s7
  %s10 = scalar_select 0, %s9, %s7
  $region1: #{tpu_custom_call.1} parent=0
    #allocation2 [shape = 'u8[1024]{0}', space=vmem, size = 0x400, scoped, tag = 'output window, operand 0']
    #allocation3 [shape = 's32[2]{0}', space=sflag, size = 0x8, scoped, tag = 'scoped memory for tpu_custom_call.1']
    %11 = vsyncpa [#allocation3], 0
    %s12 = scalar_lea.sflag [#allocation3], 1
    %13 = vsyncpa %s12, 0
    loop: start=0, step=1, limit=4
    $region2: #{tpu_custom_call.1} parent=1 // loop_pre_header
      _
    $region3: #{tpu_custom_call.1} parent=1 // loop_header
      %s15 = sphi 0, %s19
      %p16 = scmp.ge.s32.totalorder %s15, 4
      %s25 = sphi 0, %s27
      %s28 = sphi 0, %s25
      %s29 = sphi 0, %s28
      %s45 = sphi 0, %s29
      %s51 = sphi 0, %s53
      %s54 = sphi 0, %s51
      %s55 = sphi 0, %s54
      %s71 = sphi 0, %s55
      %s75 = sphi 0, %s75
      %s77 = sphi 0, %s75
      %s78 = sphi 0, %s77
      %s92 = sphi 0, %s78
      %s96 = sphi 0, %s96
      %s98 = sphi 0, %s96
      %s99 = sphi 0, %s98
      %s113 = sphi 0, %s99
      %s117 = sphi 0, %s117
      %s119 = sphi 0, %s117
      %s120 = sphi 0, %s119
      %s134 = sphi 0, %s120
      %s138 = sphi 0, %s138
      %s140 = sphi 0, %s138
      %s141 = sphi 0, %s140
      %s155 = sphi 0, %s141
      %s161 = sphi 0, %s163
      %s164 = sphi 0, %s161
      %s165 = sphi 0, %s164
      %s181 = sphi 0, %s165
    $region4: #{tpu_custom_call.1} parent=1 // loop_header_branch
      %18 = sbr.rel (%p16) target = $region8
    $region5: #{tpu_custom_call.1} parent=1 // loop_body
      %s20 = ssub.s32 %s15, 1
      %s21 = ssub.s32 %s15, 2
      %s22 = sadd.s32 %s15, 1
      %s23 = ssub.s32 %s15, %s22
      %p24 = scmp.eq.s32.totalorder %s23, 0
      %s26 = sadd.s32 %s25, 1
      %s27 = scalar_select %p24, %s25, %s26
      %p30 = pneg %p24
      %p31 = scmp.eq.s32.totalorder %s15, 1
      %p32 = por %p30, %p31
      %p33 = scmp.ne.s32.totalorder %s25, %s28
      %p34 = scmp.eq.s32.totalorder %s15, 0
      %p35 = por %p33, %p34
      %p36 = scmp.ne.s32.totalorder %s25, %s28
      %p37 = scmp.eq.s32.totalorder %s20, 1
      %p38 = por %p36, %p37
      %p39 = scmp.ne.s32.totalorder %s28, %s29
      %p40 = scmp.eq.s32.totalorder %s20, 0
      %p41 = por %p39, %p40
      %p42 = scmp.ne.s32.totalorder %s28, %s29
      %p43 = scmp.eq.s32.totalorder %s21, 1
      %p44 = por %p42, %p43
      %p46 = scmp.ne.s32.totalorder %s29, %s45
      %p47 = scmp.eq.s32.totalorder %s21, 0
      %p48 = por %p46, %p47
      %s49 = ssub.s32 %s15, %s22
      %p50 = scmp.eq.s32.totalorder %s49, 0
      %s52 = sadd.s32 %s51, 1
      %s53 = scalar_select %p50, %s51, %s52
      %p56 = pneg %p50
      %p57 = scmp.eq.s32.totalorder %s15, 1
      %p58 = por %p56, %p57
      %p59 = scmp.ne.s32.totalorder %s51, %s54
      %p60 = scmp.eq.s32.totalorder %s15, 0
      %p61 = por %p59, %p60
      %p62 = scmp.ne.s32.totalorder %s51, %s54
      %p63 = scmp.eq.s32.totalorder %s20, 1
      %p64 = por %p62, %p63
      %p65 = scmp.ne.s32.totalorder %s54, %s55
      %p66 = scmp.eq.s32.totalorder %s20, 0
      %p67 = por %p65, %p66
      %p68 = scmp.ne.s32.totalorder %s54, %s55
      %p69 = scmp.eq.s32.totalorder %s21, 1
      %p70 = por %p68, %p69
      %p72 = scmp.ne.s32.totalorder %s55, %s71
      %p73 = scmp.eq.s32.totalorder %s21, 0
      %p74 = por %p72, %p73
      %s76 = sadd.s32 %s75, 1
      %p79 = scmp.eq.s32.totalorder %s15, 1
      %p80 = scmp.ne.s32.totalorder %s75, %s77
      %p81 = scmp.eq.s32.totalorder %s15, 0
      %p82 = por %p80, %p81
      %p83 = scmp.ne.s32.totalorder %s75, %s77
      %p84 = scmp.eq.s32.totalorder %s20, 1
      %p85 = por %p83, %p84
      %p86 = scmp.ne.s32.totalorder %s77, %s78
      %p87 = scmp.eq.s32.totalorder %s20, 0
      %p88 = por %p86, %p87
      %p89 = scmp.ne.s32.totalorder %s77, %s78
      %p90 = scmp.eq.s32.totalorder %s21, 1
      %p91 = por %p89, %p90
      %p93 = scmp.ne.s32.totalorder %s78, %s92
      %p94 = scmp.eq.s32.totalorder %s21, 0
      %p95 = por %p93, %p94
      %s97 = sadd.s32 %s96, 1
      %p100 = scmp.eq.s32.totalorder %s15, 1
      %p101 = scmp.ne.s32.totalorder %s96, %s98
      %p102 = scmp.eq.s32.totalorder %s15, 0
      %p103 = por %p101, %p102
      %p104 = scmp.ne.s32.totalorder %s96, %s98
      %p105 = scmp.eq.s32.totalorder %s20, 1
      %p106 = por %p104, %p105
      %p107 = scmp.ne.s32.totalorder %s98, %s99
      %p108 = scmp.eq.s32.totalorder %s20, 0
      %p109 = por %p107, %p108
      %p110 = scmp.ne.s32.totalorder %s98, %s99
      %p111 = scmp.eq.s32.totalorder %s21, 1
      %p112 = por %p110, %p111
      %p114 = scmp.ne.s32.totalorder %s99, %s113
      %p115 = scmp.eq.s32.totalorder %s21, 0
      %p116 = por %p114, %p115
      %s118 = sadd.s32 %s117, 1
      %p121 = scmp.eq.s32.totalorder %s15, 1
      %p122 = scmp.ne.s32.totalorder %s117, %s119
      %p123 = scmp.eq.s32.totalorder %s15, 0
      %p124 = por %p122, %p123
      %p125 = scmp.ne.s32.totalorder %s117, %s119
      %p126 = scmp.eq.s32.totalorder %s20, 1
      %p127 = por %p125, %p126
      %p128 = scmp.ne.s32.totalorder %s119, %s120
      %p129 = scmp.eq.s32.totalorder %s20, 0
      %p130 = por %p128, %p129
      %p131 = scmp.ne.s32.totalorder %s119, %s120
      %p132 = scmp.eq.s32.totalorder %s21, 1
      %p133 = por %p131, %p132
      %p135 = scmp.ne.s32.totalorder %s120, %s134
      %p136 = scmp.eq.s32.totalorder %s21, 0
      %p137 = por %p135, %p136
      %s139 = sadd.s32 %s138, 1
      %p142 = scmp.eq.s32.totalorder %s15, 1
      %p143 = scmp.ne.s32.totalorder %s138, %s140
      %p144 = scmp.eq.s32.totalorder %s15, 0
      %p145 = por %p143, %p144
      %p146 = scmp.ne.s32.totalorder %s138, %s140
      %p147 = scmp.eq.s32.totalorder %s20, 1
      %p148 = por %p146, %p147
      %p149 = scmp.ne.s32.totalorder %s140, %s141
      %p150 = scmp.eq.s32.totalorder %s20, 0
      %p151 = por %p149, %p150
      %p152 = scmp.ne.s32.totalorder %s140, %s141
      %p153 = scmp.eq.s32.totalorder %s21, 1
      %p154 = por %p152, %p153
      %p156 = scmp.ne.s32.totalorder %s141, %s155
      %p157 = scmp.eq.s32.totalorder %s21, 0
      %p158 = por %p156, %p157
      %s159 = ssub.s32 %s15, %s22
      %p160 = scmp.eq.s32.totalorder %s159, 0
      %s162 = sadd.s32 %s161, 1
      %s163 = scalar_select %p160, %s161, %s162
      %p166 = pneg %p160
      %p167 = scmp.eq.s32.totalorder %s15, 1
      %p168 = por %p166, %p167
      %p169 = scmp.ne.s32.totalorder %s161, %s164
      %p170 = scmp.eq.s32.totalorder %s15, 0
      %p171 = por %p169, %p170
      %p172 = scmp.ne.s32.totalorder %s161, %s164
      %p173 = scmp.eq.s32.totalorder %s20, 1
      %p174 = por %p172, %p173
      %p175 = scmp.ne.s32.totalorder %s164, %s165
      %p176 = scmp.eq.s32.totalorder %s20, 0
      %p177 = por %p175, %p176
      %p178 = scmp.ne.s32.totalorder %s164, %s165
      %p179 = scmp.eq.s32.totalorder %s21, 1
      %p180 = por %p178, %p179
      %p182 = scmp.ne.s32.totalorder %s165, %s181
      %p183 = scmp.eq.s32.totalorder %s21, 0
      %p184 = por %p182, %p183
      %p185 = scmp.le.s32.totalorder 1, %s15
      %p186 = scmp.lt.s32.totalorder %s15, 3
      %p187 = pnand %p185, %p186
      %p188 = pneg %p187
      // Predicated region
      $region9: #{tpu_custom_call.1} parent=5 // pred_check
        _
      $region10: #{tpu_custom_call.1} parent=5 // pred_check_branch
        %190 = sbr.rel (%p187) target = $region12
      $region11: #{tpu_custom_call.1} parent=5 // pred_region
        %s191 = ssub.s32 %s15, 1
        // Predicated region
        $region13: #{tpu_custom_call.1} parent=11 // pred_check
          %p192 = pneg %p88
        $region14: #{tpu_custom_call.1} parent=11 // pred_check_branch
          %194 = sbr.rel (%p192) target = $region16
        $region15: #{tpu_custom_call.1} parent=11 // pred_region
          _
        $region16: #{tpu_custom_call.1} parent=11 // pred_fallthru
          _
        // Predicated region
        $region17: #{tpu_custom_call.1} parent=11 // pred_check
          %p195 = pneg %p109
        $region18: #{tpu_custom_call.1} parent=11 // pred_check_branch
          %197 = sbr.rel (%p195) target = $region20
        $region19: #{tpu_custom_call.1} parent=11 // pred_region
          _
        $region20: #{tpu_custom_call.1} parent=11 // pred_fallthru
          _
        // Predicated region
        $region21: #{tpu_custom_call.1} parent=11 // pred_check
          %p198 = pneg %p130
        $region22: #{tpu_custom_call.1} parent=11 // pred_check_branch
          %200 = sbr.rel (%p198) target = $region24
        $region23: #{tpu_custom_call.1} parent=11 // pred_region
          _
        $region24: #{tpu_custom_call.1} parent=11 // pred_fallthru
          _
        // Predicated region
        $region25: #{tpu_custom_call.1} parent=11 // pred_check
          %p201 = pneg %p151
        $region26: #{tpu_custom_call.1} parent=11 // pred_check_branch
          %203 = sbr.rel (%p201) target = $region28
        $region27: #{tpu_custom_call.1} parent=11 // pred_region
          _
        $region28: #{tpu_custom_call.1} parent=11 // pred_fallthru
          _
      $region12: #{tpu_custom_call.1} parent=5 // pred_fallthru
        _
      %p204 = scmp.lt.s32.totalorder %s15, 2
      // Predicated region
      $region29: #{tpu_custom_call.1} parent=5 // pred_check
        %p205 = pneg %p204
      $region30: #{tpu_custom_call.1} parent=5 // pred_check_branch
        %207 = sbr.rel (%p205) target = $region32
      $region31: #{tpu_custom_call.1} parent=5 // pred_region
        // Predicated region
        $region33: #{tpu_custom_call.1} parent=31 // pred_check
          %p208 = pneg %p35
        $region34: #{tpu_custom_call.1} parent=31 // pred_check_branch
          %210 = sbr.rel (%p208) target = $region36
        $region35: #{tpu_custom_call.1} parent=31 // pred_region
          %p211 = scmp.lt.s32.totalorder %s15, 1
          %s212 = scalar_select %p211, %s15, 1
          %s213 = smul.addr %s212, 2
          %s214 = smul.addr %s213, 4
          %s215 = scalar_lea.vmem %s0, %s214
        $region36: #{tpu_custom_call.1} parent=31 // pred_fallthru
          _
        // Predicated region
        $region37: #{tpu_custom_call.1} parent=31 // pred_check
          %p216 = pneg %p61
        $region38: #{tpu_custom_call.1} parent=31 // pred_check_branch
          %218 = sbr.rel (%p216) target = $region40
        $region39: #{tpu_custom_call.1} parent=31 // pred_region
          %p219 = scmp.lt.s32.totalorder %s15, 1
          %s220 = scalar_select %p219, %s15, 1
          %s221 = smul.addr %s220, 2
          %s222 = smul.addr %s221, 8
          %s223 = scalar_lea.vmem %s1, %s222
        $region40: #{tpu_custom_call.1} parent=31 // pred_fallthru
          _
      $region32: #{tpu_custom_call.1} parent=5 // pred_fallthru
        _
      %p224 = scmp.le.s32.totalorder 1, %s15
      %p225 = scmp.lt.s32.totalorder %s15, 3
      %p226 = pnand %p224, %p225
      %p227 = pneg %p226
      // Predicated region
      $region41: #{tpu_custom_call.1} parent=5 // pred_check
        _
      $region42: #{tpu_custom_call.1} parent=5 // pred_check_branch
        %229 = sbr.rel (%p226) target = $region44
      $region43: #{tpu_custom_call.1} parent=5 // pred_region
        %s230 = ssub.s32 %s15, 1
        %p231 = scmp.lt.s32.totalorder %s20, 1
        %s232 = scalar_select %p231, %s20, 1
        %s233 = smul.addr %s232, 2
        %s234 = smul.addr %s233, 4
        %s235 = scalar_lea.vmem %s0, %s234
        %p236 = pneg %p41
        %p237 = pneg %p38
        %p238 = scmp.lt.s32.totalorder %s20, 1
        %s239 = scalar_select %p238, %s20, 1
        %s240 = smul.addr %s239, 2
        %s241 = smul.addr %s240, 8
        %s242 = scalar_lea.vmem %s1, %s241
        %p243 = pneg %p67
        %p244 = pneg %p64
        %p245 = pneg %p88
        %p246 = pneg %p85
        %p247 = pneg %p109
        %p248 = pneg %p106
        %p249 = pneg %p130
        %p250 = pneg %p127
        %p251 = pneg %p151
        %p252 = pneg %p148
        %p253 = pneg %p177
        %p254 = pneg %p174
        %s255 = sand.u32 %s164, 1
        %s256 = scalar_lea.sflag [#allocation3], %s255
        %s257 = sand.u32 %s164, 1
        %s258 = scalar_lea.vmem [#allocation2], %s257
        %p259 = scmp.lt.s32.totalorder %s20, 1
        %s260 = scalar_select %p259, %s20, 1
        %s261 = smul.addr %s260, 2
        %s262 = smul.addr %s261, 4
        %s263 = scalar_lea.vmem %s0, %s262
        %p264 = scmp.lt.s32.totalorder %s20, 1
        %s265 = scalar_select %p264, %s20, 1
        %s266 = smul.addr %s265, 2
        %s267 = smul.addr %s266, 8
        %s268 = scalar_lea.vmem %s1, %s267
        %v270 = vld [vmem:[%s263] sm:$0xf]
        %v271 = vld [vmem:[%s263 + $0x4] sm:$0xf]
        %v272 = vld [vmem:[%s268] sm:$0xff]
        %v273 = vld [vmem:[%s268 + $0x8] sm:$0xff]
        %v274 = vld [vmem:[%s2] sm:$0xf]
        %vm275 = vcmask 31744
        %v277 = vsel %vm275, %v272, 0
        %v280 = vsel %vm275, %v273, 0
        %vm282 = vcmask 1043456
        %v284 = vsel %vm282, %v274, 0
        %286 = vmatprep.subr.mxu0 0.0
        %287 = vmatpush1.msra.mxu0 %v284
        %288 = vmatprep.subr.mxu0 0.0
        %289 = vmatpush1.msra.mxu0 0.0
        %290 = vmatprep.subr.mxu0 0.0
        %291 = vmatpush1.msra.mxu0 0.0
        %292 = vmatprep.subr.mxu0 0.0
        %293 = vmatpush1.msra.mxu0 0.0
        %294 = vmatprep.subr.mxu0 0.0
        %295 = vmatpush1.msra.mxu0 0.0
        %296 = vmatprep.subr.mxu0 0.0
        %297 = vmatpush1.msra.mxu0 0.0
        %298 = vmatprep.subr.mxu0 0.0
        %299 = vmatpush1.msra.mxu0 0.0
        %300 = vmatprep.subr.mxu0 0.0
        %301 = vmatpush1.msra.mxu0 0.0
        %302 = vmatprep.subr.mxu0 0.0
        %303 = vmatpush1.msra.mxu0 0.0
        %304 = vmatprep.subr.mxu0 0.0
        %305 = vmatpush1.msra.mxu0 0.0
        %306 = vmatprep.subr.mxu0 0.0
        %307 = vmatpush1.msra.mxu0 0.0
        %308 = vmatprep.subr.mxu0 0.0
        %309 = vmatpush1.msra.mxu0 0.0
        %310 = vmatprep.subr.mxu0 0.0
        %311 = vmatpush1.msra.mxu0 0.0
        %312 = vmatprep.subr.mxu0 0.0
        %313 = vmatpush1.msra.mxu0 0.0
        %314 = vmatprep.subr.mxu0 0.0
        %315 = vmatpush1.msra.mxu0 0.0
        %316 = vmatprep.subr.mxu0 0.0
        %317 = vmatpush1.msra.mxu0 0.0
        %318 = vmatprep.subr.mxu0 0.0
        %319 = vmatpush1.msra.mxu0 0.0
        %320 = vmatprep.subr.mxu0 0.0
        %321 = vmatpush1.msra.mxu0 0.0
        %322 = vmatprep.subr.mxu0 0.0
        %323 = vmatpush1.msra.mxu0 0.0
        %324 = vmatprep.subr.mxu0 0.0
        %325 = vmatpush1.msra.mxu0 0.0
        %326 = vmatprep.subr.mxu0 0.0
        %327 = vmatpush1.msra.mxu0 0.0
        %328 = vmatprep.subr.mxu0 0.0
        %329 = vmatpush1.msra.mxu0 0.0
        %330 = vmatprep.subr.mxu0 0.0
        %331 = vmatpush1.msra.mxu0 0.0
        %332 = vmatprep.subr.mxu0 0.0
        %333 = vmatpush1.msra.mxu0 0.0
        %334 = vmatprep.subr.mxu0 0.0
        %335 = vmatpush1.msra.mxu0 0.0
        %336 = vmatprep.subr.mxu0 0.0
        %337 = vmatpush1.msra.mxu0 0.0
        %338 = vmatprep.subr.mxu0 0.0
        %339 = vmatpush1.msra.mxu0 0.0
        %340 = vmatprep.subr.mxu0 0.0
        %341 = vmatpush1.msra.mxu0 0.0
        %342 = vmatprep.subr.mxu0 0.0
        %343 = vmatpush1.msra.mxu0 0.0
        %344 = vmatprep.subr.mxu0 0.0
        %345 = vmatpush1.msra.mxu0 0.0
        %346 = vmatprep.subr.mxu0 0.0
        %347 = vmatpush1.msra.mxu0 0.0
        %348 = vmatprep.subr.mxu0 0.0
        %349 = vmatpush1.msra.mxu0 0.0
        %350 = vmatprep.mubr.f32.mxu0 0.0
        %351 = vmatmul.mubr.f32.gmra.mrb[0].mxu0 %v277
        %v352 = vpop.f32.mrb[0].mxu0
        %v353 = vadd.f32 0.0, %v352
        %v354 = vpop.f32.mrb[0].mxu0
        %355 = vmatprep.mubr.f32.mxu0 0.0
        %356 = vmatmul.mubr.f32.gmra.mrb[0].mxu0 %v280
        %v357 = vpop.f32.mrb[0].mxu0
        %v358 = vadd.f32 0.0, %v357
        %v359 = vpop.f32.mrb[0].mxu0
        %360 = vdwg.mxu0
        %v361 = vld [vmem:[%s3] sm:$0x1]
        %v363 = vlaneseq
        %v364 = vshrl.u32 %v363, 7
        %v365 = vsub.s32 0, %v364
        %v366 = vrot.slane %v361, %v365
        %v368 = vadd.f32 %v353, %v366
        %v369 = vadd.f32 %v358, %v366
        %v370 = vpack.c.bf16 %v369, %v368
        %v373 = vunpack.c.l.b16 %v270
        %v374 = vunpack.c.l.b16 %v271
        %v375 = vpack.c.b16 %v374, %v373
        %vm376 = vcmask 130048
        %v378 = vsel %vm376, %v375, 0
        %380 = vmatprep.subr.bf16.mxu0 0
        %381 = vmatpush1.bf16.msra.mxu0 %v370
        %382 = vmatprep.subr.bf16.mxu0 0
        %383 = vmatpush1.bf16.msra.mxu0 0
        %384 = vmatprep.subr.bf16.mxu0 0
        %385 = vmatpush1.bf16.msra.mxu0 0
        %386 = vmatprep.subr.bf16.mxu0 0
        %387 = vmatpush1.bf16.msra.mxu0 0
        %388 = vmatprep.subr.bf16.mxu0 0
        %389 = vmatpush1.bf16.msra.mxu0 0
        %390 = vmatprep.subr.bf16.mxu0 0
        %391 = vmatpush1.bf16.msra.mxu0 0
        %392 = vmatprep.subr.bf16.mxu0 0
        %393 = vmatpush1.bf16.msra.mxu0 0
        %394 = vmatprep.subr.bf16.mxu0 0
        %395 = vmatpush1.bf16.msra.mxu0 0
        %396 = vmatprep.subr.bf16.mxu0 0
        %397 = vmatpush1.bf16.msra.mxu0 0
        %398 = vmatprep.subr.bf16.mxu0 0
        %399 = vmatpush1.bf16.msra.mxu0 0
        %400 = vmatprep.subr.bf16.mxu0 0
        %401 = vmatpush1.bf16.msra.mxu0 0
        %402 = vmatprep.subr.bf16.mxu0 0
        %403 = vmatpush1.bf16.msra.mxu0 0
        %404 = vmatprep.subr.bf16.mxu0 0
        %405 = vmatpush1.bf16.msra.mxu0 0
        %406 = vmatprep.subr.bf16.mxu0 0
        %407 = vmatpush1.bf16.msra.mxu0 0
        %408 = vmatprep.subr.bf16.mxu0 0
        %409 = vmatpush1.bf16.msra.mxu0 0
        %410 = vmatprep.subr.bf16.mxu0 0
        %411 = vmatpush1.bf16.msra.mxu0 0
        %412 = vmatprep.mubr.bf16.mxu0 0
        %413 = vmatmul.mubr.bf16.gmra.mrb[0].mxu0 %v378
        %v414 = vpop.f32.mrb[0].mxu0
        %v415 = vadd.f32 0.0, %v414
        %v416 = vpop.f32.mrb[0].mxu0
        %v417 = vpop.f32.mrb[0].mxu0
        %v418 = vadd.f32 0.0, %v417
        %v419 = vpop.f32.mrb[0].mxu0
        %420 = vdwg.mxu0
        %v421 = vadd.f32 %v415, 1.0
        %v422 = vadd.f32 %v418, 1.0
        %vm423 = vcmp.eq.f32.partialorder %v421, 0.0
        %vm424 = vcmp.eq.f32.partialorder %v422, 0.0
        %v425 = vrcp.pop %v421
        %v426 = vmul.f32 1.0, %v425
        %v427 = vrcp.pop %v422
        %v428 = vmul.f32 1.0, %v427
        %v429 = vsel %vm423, 0.0, %v426
        %v430 = vsel %vm424, 0.0, %v428
        %v431 = vadd.f32 %v415, %v368
        %v432 = vadd.f32 %v418, %v369
        %434 = vset.pattern.permute.xlu0 32
        %435 = vperm.xlu0 %434, %v429
        %v436 = vpop.permute.xlu0 %435
        %439 = vset.pattern.permute.xlu0 32
        %440 = vperm.xlu0 %439, %v430
        %v441 = vpop.permute.xlu0 %440
        %v443 = vmul.f32 %v436, %v431
        %v444 = vmul.f32 %v441, %v432
        %v445 = vmax.f32 %v443, 0.0
        %v446 = vmax.f32 %v444, 0.0
        %v447 = vld [vmem:[%s4] sm:$0xff]
        %v448 = vld [vmem:[%s4 + $0x8] sm:$0xff]
        %v449 = vld [vmem:[%s4 + $0x10] sm:$0xff]
        %v450 = vld [vmem:[%s4 + $0x18] sm:$0xff]
        %vm451 = vcmask 261120
        %v453 = vsel %vm451, %v445, 0
        %v456 = vsel %vm451, %v446, 0
        %458 = vmatprep.subr.mxu0 0.0
        %459 = vmatpush1.msra.mxu0 %v447
        %460 = vmatprep.subr.mxu0 0.0
        %461 = vmatpush1.msra.mxu0 %v448
        %462 = vmatprep.subr.mxu0 0.0
        %463 = vmatpush1.msra.mxu0 %v449
        %464 = vmatprep.subr.mxu0 0.0
        %465 = vmatpush1.msra.mxu0 %v450
        %466 = vmatprep.subr.mxu0 0.0
        %467 = vmatpush1.msra.mxu0 0.0
        %468 = vmatprep.subr.mxu0 0.0
        %469 = vmatpush1.msra.mxu0 0.0
        %470 = vmatprep.subr.mxu0 0.0
        %471 = vmatpush1.msra.mxu0 0.0
        %472 = vmatprep.subr.mxu0 0.0
        %473 = vmatpush1.msra.mxu0 0.0
        %474 = vmatprep.subr.mxu0 0.0
        %475 = vmatpush1.msra.mxu0 0.0
        %476 = vmatprep.subr.mxu0 0.0
        %477 = vmatpush1.msra.mxu0 0.0
        %478 = vmatprep.subr.mxu0 0.0
        %479 = vmatpush1.msra.mxu0 0.0
        %480 = vmatprep.subr.mxu0 0.0
        %481 = vmatpush1.msra.mxu0 0.0
        %482 = vmatprep.subr.mxu0 0.0
        %483 = vmatpush1.msra.mxu0 0.0
        %484 = vmatprep.subr.mxu0 0.0
        %485 = vmatpush1.msra.mxu0 0.0
        %486 = vmatprep.subr.mxu0 0.0
        %487 = vmatpush1.msra.mxu0 0.0
        %488 = vmatprep.subr.mxu0 0.0
        %489 = vmatpush1.msra.mxu0 0.0
        %490 = vmatprep.subr.mxu0 0.0
        %491 = vmatpush1.msra.mxu0 0.0
        %492 = vmatprep.subr.mxu0 0.0
        %493 = vmatpush1.msra.mxu0 0.0
        %494 = vmatprep.subr.mxu0 0.0
        %495 = vmatpush1.msra.mxu0 0.0
        %496 = vmatprep.subr.mxu0 0.0
        %497 = vmatpush1.msra.mxu0 0.0
        %498 = vmatprep.subr.mxu0 0.0
        %499 = vmatpush1.msra.mxu0 0.0
        %500 = vmatprep.subr.mxu0 0.0
        %501 = vmatpush1.msra.mxu0 0.0
        %502 = vmatprep.subr.mxu0 0.0
        %503 = vmatpush1.msra.mxu0 0.0
        %504 = vmatprep.subr.mxu0 0.0
        %505 = vmatpush1.msra.mxu0 0.0
        %506 = vmatprep.subr.mxu0 0.0
        %507 = vmatpush1.msra.mxu0 0.0
        %508 = vmatprep.subr.mxu0 0.0
        %509 = vmatpush1.msra.mxu0 0.0
        %510 = vmatprep.subr.mxu0 0.0
        %511 = vmatpush1.msra.mxu0 0.0
        %512 = vmatprep.subr.mxu0 0.0
        %513 = vmatpush1.msra.mxu0 0.0
        %514 = vmatprep.subr.mxu0 0.0
        %515 = vmatpush1.msra.mxu0 0.0
        %516 = vmatprep.subr.mxu0 0.0
        %517 = vmatpush1.msra.mxu0 0.0
        %518 = vmatprep.subr.mxu0 0.0
        %519 = vmatpush1.msra.mxu0 0.0
        %520 = vmatprep.subr.mxu0 0.0
        %521 = vmatpush1.msra.mxu0 0.0
        %522 = vmatprep.mubr.f32.mxu0 0.0
        %523 = vmatmul.mubr.f32.gmra.mrb[0].mxu0 %v453
        %v524 = vpop.f32.mrb[0].mxu0
        %v525 = vadd.f32 0.0, %v524
        %v526 = vpop.f32.mrb[0].mxu0
        %527 = vmatprep.mubr.f32.mxu0 0.0
        %528 = vmatmul.mubr.f32.gmra.mrb[0].mxu0 %v456
        %v529 = vpop.f32.mrb[0].mxu0
        %v530 = vadd.f32 0.0, %v529
        %v531 = vpop.f32.mrb[0].mxu0
        %532 = vdwg.mxu0
        %v533 = vld [vmem:[%s5] sm:$0x1]
        %v535 = vlaneseq
        %v536 = vshrl.u32 %v535, 7
        %v537 = vsub.s32 0, %v536
        %v538 = vrot.slane %v533, %v537
        %v540 = vadd.f32 %v525, %v538
        %v541 = vadd.f32 %v530, %v538
        %v542 = vpack.c.bf16 %v541, %v540
        %543 = vmatprep.subr.bf16.mxu0 0
        %544 = vmatpush1.bf16.msra.mxu0 %v542
        %545 = vmatprep.subr.bf16.mxu0 0
        %546 = vmatpush1.bf16.msra.mxu0 0
        %547 = vmatprep.subr.bf16.mxu0 0
        %548 = vmatpush1.bf16.msra.mxu0 0
        %549 = vmatprep.subr.bf16.mxu0 0
        %550 = vmatpush1.bf16.msra.mxu0 0
        %551 = vmatprep.subr.bf16.mxu0 0
        %552 = vmatpush1.bf16.msra.mxu0 0
        %553 = vmatprep.subr.bf16.mxu0 0
        %554 = vmatpush1.bf16.msra.mxu0 0
        %555 = vmatprep.subr.bf16.mxu0 0
        %556 = vmatpush1.bf16.msra.mxu0 0
        %557 = vmatprep.subr.bf16.mxu0 0
        %558 = vmatpush1.bf16.msra.mxu0 0
        %559 = vmatprep.subr.bf16.mxu0 0
        %560 = vmatpush1.bf16.msra.mxu0 0
        %561 = vmatprep.subr.bf16.mxu0 0
        %562 = vmatpush1.bf16.msra.mxu0 0
        %563 = vmatprep.subr.bf16.mxu0 0
        %564 = vmatpush1.bf16.msra.mxu0 0
        %565 = vmatprep.subr.bf16.mxu0 0
        %566 = vmatpush1.bf16.msra.mxu0 0
        %567 = vmatprep.subr.bf16.mxu0 0
        %568 = vmatpush1.bf16.msra.mxu0 0
        %569 = vmatprep.subr.bf16.mxu0 0
        %570 = vmatpush1.bf16.msra.mxu0 0
        %571 = vmatprep.subr.bf16.mxu0 0
        %572 = vmatpush1.bf16.msra.mxu0 0
        %573 = vmatprep.subr.bf16.mxu0 0
        %574 = vmatpush1.bf16.msra.mxu0 0
        %575 = vmatprep.mubr.bf16.mxu0 0
        %576 = vmatmul.mubr.bf16.gmra.mrb[0].mxu0 %v378
        %v577 = vpop.f32.mrb[0].mxu0
        %v578 = vadd.f32 %v540, %v577
        %v579 = vpop.f32.mrb[0].mxu0
        %v580 = vpop.f32.mrb[0].mxu0
        %v581 = vadd.f32 %v541, %v580
        %v582 = vpop.f32.mrb[0].mxu0
        %583 = vdwg.mxu0
        %v584 = vmul.f32 %v436, %v578
        %v585 = vmul.f32 %v441, %v581
        %v586 = vmax.f32 %v584, 0.0
        %v587 = vmax.f32 %v585, 0.0
        %v588 = vcombine.high %v586, 0.0
        %v590 = vunpack.c.l.s4 1983009808
        %v591 = vunpack.c.0.s8 %v590
        %v592 = vlaneseq
        %v593 = vshrl.u32 %v592, 7
        %v594 = vsub.s32 %v591, %v593
        %v595 = vrot.slane %v586, %v594
        %v597 = vunpack.c.l.s4 1983009808
        %v598 = vunpack.c.0.s8 %v597
        %v599 = vlaneseq
        %v600 = vshrl.u32 %v599, 7
        %v601 = vsub.s32 %v598, %v600
        %v602 = vrot.slane %v588, %v601
        %v603 = vcombine.high %v595, 0.0
        %v605 = vunpack.c.l.s4 1934713408
        %v606 = vunpack.c.0.s8 %v605
        %v607 = vlaneseq
        %v608 = vshrl.u32 %v607, 7
        %v609 = vsub.s32 %v606, %v608
        %v610 = vrot.slane %v595, %v609
        %v612 = vunpack.c.l.s4 1934713408
        %v613 = vunpack.c.0.s8 %v612
        %v614 = vlaneseq
        %v615 = vshrl.u32 %v614, 7
        %v616 = vsub.s32 %v613, %v615
        %v617 = vrot.slane %v603, %v616
        %v618 = vcombine.high %v602, 0.0
        %v620 = vunpack.c.l.s4 1934713408
        %v621 = vunpack.c.0.s8 %v620
        %v622 = vlaneseq
        %v623 = vshrl.u32 %v622, 7
        %v624 = vsub.s32 %v621, %v623
        %v625 = vrot.slane %v602, %v624
        %v627 = vunpack.c.l.s4 1934713408
        %v628 = vunpack.c.0.s8 %v627
        %v629 = vlaneseq
        %v630 = vshrl.u32 %v629, 7
        %v631 = vsub.s32 %v628, %v630
        %v632 = vrot.slane %v618, %v631
        %v633 = vcombine.high %v610, 0.0
        %v634 = vcombine.high %v617, 0.0
        %v635 = vcombine.high %v625, 0.0
        %v636 = vcombine.high %v632, 0.0
        %v637 = vcombine.high %v587, 0.0
        %v639 = vunpack.c.l.s4 1983009808
        %v640 = vunpack.c.0.s8 %v639
        %v641 = vlaneseq
        %v642 = vshrl.u32 %v641, 7
        %v643 = vsub.s32 %v640, %v642
        %v644 = vrot.slane %v587, %v643
        %v646 = vunpack.c.l.s4 1983009808
        %v647 = vunpack.c.0.s8 %v646
        %v648 = vlaneseq
        %v649 = vshrl.u32 %v648, 7
        %v650 = vsub.s32 %v647, %v649
        %v651 = vrot.slane %v637, %v650
        %v652 = vcombine.high %v644, 0.0
        %v654 = vunpack.c.l.s4 1934713408
        %v655 = vunpack.c.0.s8 %v654
        %v656 = vlaneseq
        %v657 = vshrl.u32 %v656, 7
        %v658 = vsub.s32 %v655, %v657
        %v659 = vrot.slane %v644, %v658
        %v661 = vunpack.c.l.s4 1934713408
        %v662 = vunpack.c.0.s8 %v661
        %v663 = vlaneseq
        %v664 = vshrl.u32 %v663, 7
        %v665 = vsub.s32 %v662, %v664
        %v666 = vrot.slane %v652, %v665
        %v667 = vcombine.high %v651, 0.0
        %v669 = vunpack.c.l.s4 1934713408
        %v670 = vunpack.c.0.s8 %v669
        %v671 = vlaneseq
        %v672 = vshrl.u32 %v671, 7
        %v673 = vsub.s32 %v670, %v672
        %v674 = vrot.slane %v651, %v673
        %v676 = vunpack.c.l.s4 1934713408
        %v677 = vunpack.c.0.s8 %v676
        %v678 = vlaneseq
        %v679 = vshrl.u32 %v678, 7
        %v680 = vsub.s32 %v677, %v679
        %v681 = vrot.slane %v667, %v680
        %v682 = vcombine.high %v659, 0.0
        %v683 = vcombine.high %v666, 0.0
        %v684 = vcombine.high %v674, 0.0
        %v685 = vcombine.high %v681, 0.0
        %687 = vrot.lane.b32.xlu0 %v633, 8
        %v688 = vpop.permute.xlu0 %687
        %691 = vrot.lane.b32.xlu0 %v617, 16
        %v692 = vpop.permute.xlu0 %691
        %695 = vrot.lane.b32.xlu0 %v634, 24
        %v696 = vpop.permute.xlu0 %695
        %699 = vrot.lane.b32.xlu0 %v625, 32
        %v700 = vpop.permute.xlu0 %699
        %703 = vrot.lane.b32.xlu0 %v635, 40
        %v704 = vpop.permute.xlu0 %703
        %707 = vrot.lane.b32.xlu0 %v632, 48
        %v708 = vpop.permute.xlu0 %707
        %711 = vrot.lane.b32.xlu0 %v636, 56
        %v712 = vpop.permute.xlu0 %711
        %715 = vrot.lane.b32.xlu0 %v659, 64
        %v716 = vpop.permute.xlu0 %715
        %719 = vrot.lane.b32.xlu0 %v682, 72
        %v720 = vpop.permute.xlu0 %719
        %723 = vrot.lane.b32.xlu0 %v666, 80
        %v724 = vpop.permute.xlu0 %723
        %727 = vrot.lane.b32.xlu0 %v683, 88
        %v728 = vpop.permute.xlu0 %727
        %731 = vrot.lane.b32.xlu0 %v674, 96
        %v732 = vpop.permute.xlu0 %731
        %735 = vrot.lane.b32.xlu0 %v684, 104
        %v736 = vpop.permute.xlu0 %735
        %739 = vrot.lane.b32.xlu0 %v681, 112
        %v740 = vpop.permute.xlu0 %739
        %743 = vrot.lane.b32.xlu0 %v685, 120
        %v744 = vpop.permute.xlu0 %743
        %vm746 = vcmask 64512
        %v747 = vsel %vm746, %v610, %v688
        %v748 = vsel %vm376, %v747, %v692
        %vm749 = vcmask 195584
        %v750 = vsel %vm749, %v748, %v696
        %v751 = vsel %vm451, %v750, %v700
        %vm752 = vcmask 326656
        %v753 = vsel %vm752, %v751, %v704
        %vm754 = vcmask 392192
        %v755 = vsel %vm754, %v753, %v708
        %vm756 = vcmask 457728
        %v757 = vsel %vm756, %v755, %v712
        %vm758 = vcmask 523264
        %v759 = vsel %vm758, %v757, %v716
        %vm760 = vcmask 588800
        %v761 = vsel %vm760, %v759, %v720
        %vm762 = vcmask 654336
        %v763 = vsel %vm762, %v761, %v724
        %vm764 = vcmask 719872
        %v765 = vsel %vm764, %v763, %v728
        %vm766 = vcmask 785408
        %v767 = vsel %vm766, %v765, %v732
        %vm768 = vcmask 850944
        %v769 = vsel %vm768, %v767, %v736
        %vm770 = vcmask 916480
        %v771 = vsel %vm770, %v769, %v740
        %vm772 = vcmask 982016
        %v773 = vsel %vm772, %v771, %v744
        %774 = vst [vmem:[%s258] sm:$0x1] %v773
        %s775 = sand.u32 %s164, 1
        %s776 = scalar_lea.sflag [#allocation3], %s775
        %s777 = sand.u32 %s164, 1
        %s778 = scalar_lea.vmem [#allocation2], %s777
        // Predicated region
        $region45: #{tpu_custom_call.1} parent=43 // pred_check
          %p779 = pneg %p174
        $region46: #{tpu_custom_call.1} parent=43 // pred_check_branch
          %781 = sbr.rel (%p779) target = $region48
        $region47: #{tpu_custom_call.1} parent=43 // pred_region
          %s783 = ssub.s32 16, 16
          %784 = vsyncadd %s776, %s783
          %s785 = smul.addr %s20, 16
          %s786 = scalar_lea.hbm %s6, %s785
          %s788 = sshll.u32 %s778, 4
          %s789 = int_to_ptr.vmem [resolvable:$true] %s788
          %791 = dma.vmem_to_hbm [thread:$0]  %s789, 16, %s786, %s776
        $region48: #{tpu_custom_call.1} parent=43 // pred_fallthru
          _
      $region44: #{tpu_custom_call.1} parent=5 // pred_fallthru
        _
      %p792 = scmp.le.s32.totalorder 2, %s15
      // Predicated region
      $region49: #{tpu_custom_call.1} parent=5 // pred_check
        %p793 = pneg %p792
      $region50: #{tpu_custom_call.1} parent=5 // pred_check_branch
        %795 = sbr.rel (%p793) target = $region52
      $region51: #{tpu_custom_call.1} parent=5 // pred_region
        %s796 = ssub.s32 %s15, 2
        // Predicated region
        $region53: #{tpu_custom_call.1} parent=51 // pred_check
          %p797 = pneg %p180
        $region54: #{tpu_custom_call.1} parent=51 // pred_check_branch
          %799 = sbr.rel (%p797) target = $region56
        $region55: #{tpu_custom_call.1} parent=51 // pred_region
          %s800 = sand.u32 %s165, 1
          %s801 = scalar_lea.sflag [#allocation3], %s800
          %s802 = sand.u32 %s165, 1
          %s803 = scalar_lea.vmem [#allocation2], %s802
          %804 = dma.done %s801, 16
        $region56: #{tpu_custom_call.1} parent=51 // pred_fallthru
          _
      $region52: #{tpu_custom_call.1} parent=5 // pred_fallthru
        _
    $region6: #{tpu_custom_call.1} parent=1 // loop_footer
      %s19 = sadd.s32 1, %s15
    $region7: #{tpu_custom_call.1} parent=1 // loop_footer_branch
      %14 = sbr.rel target = $region3
    $region8: #{tpu_custom_call.1} parent=1 // loop_exit
      _
    %805 = vsyncpa [#allocation3], 1
    %s806 = scalar_lea.sflag [#allocation3], 1
    %807 = vsyncpa %s806, 1

</llo_original>
